<compile_context>
chip_gen: v7x
topology: tpu7x:2x2x1
jax: 0.10.0
libtpu: 0.0.40
codegen_flags: <defaults>
</compile_context>

<pallas_src>
import jax
import jax.numpy as jnp
from jax import lax
from jax.experimental import pallas as pl
from jax.experimental.pallas import tpu as pltpu

# Tile-aligned halo offsets: the image lives at (row, col) = (8, 128) inside the
# padded VMEM scratch, so the zero border required by padding=1 sits in the
# aligned margins and the interior store is fully aligned.
_PAD_R = 8
_PAD_C = 128
_EPS = 1e-6


def _sobel_edge(p_ref, H, W):
    """|Sobel_x| + |Sobel_y| of the zero-padded image held in scratch `p_ref`.

    p_ref has shape (H + 2*_PAD_R, W + 2*_PAD_C); its margins are zero and the
    [_PAD_R:_PAD_R+H, _PAD_C:_PAD_C+W] window holds the image.
    tap(ky, kx)[i, j] == padded_image[i + ky, j + kx]  (zero outside the image),
    matching torch Conv2d (cross-correlation) with padding=1.
    """
    r0 = _PAD_R - 1
    c0 = _PAD_C - 1

    def tap(ky, kx):
        return p_ref[r0 + ky: r0 + ky + H, c0 + kx: c0 + kx + W]

    t00 = tap(0, 0); t01 = tap(0, 1); t02 = tap(0, 2)
    t10 = tap(1, 0); t12 = tap(1, 2)
    t20 = tap(2, 0); t21 = tap(2, 1); t22 = tap(2, 2)

    # Kx = [[1, 0, -1], [2, 0, -2], [1, 0, -1]]
    edge_x = (t00 - t02) + 2.0 * (t10 - t12) + (t20 - t22)
    # Ky = [[1, 2, 1], [0, 0, 0], [-1, -2, -1]]
    edge_y = (t00 + 2.0 * t01 + t02) - (t20 + 2.0 * t21 + t22)
    return jnp.abs(edge_x) + jnp.abs(edge_y)


def _l1_sobel_kernel(x_ref, y_ref, out_ref, xp_ref, yp_ref):
    # x_ref, y_ref : (1, H, W) image blocks for one batch element (VMEM).
    # out_ref      : (1, 8, 128) lane-dense per-batch partial-sum tile (VMEM).
    # xp_ref/yp_ref: zero-padded VMEM scratch images.
    H = x_ref.shape[1]
    W = x_ref.shape[2]

    # Build the zero halo in VMEM (no HBM-side pad): zero the scratch, then drop
    # the image in at the tile-aligned (_PAD_R, _PAD_C) offset.  Re-zeroing every
    # step keeps grid iterations fully independent ("parallel"-safe on v7x).
    xp_ref[...] = jnp.zeros_like(xp_ref)
    yp_ref[...] = jnp.zeros_like(yp_ref)
    xp_ref[_PAD_R:_PAD_R + H, _PAD_C:_PAD_C + W] = x_ref[0]
    yp_ref[_PAD_R:_PAD_R + H, _PAD_C:_PAD_C + W] = y_ref[0]

    diff = _sobel_edge(xp_ref, H, W) - _sobel_edge(yp_ref, H, W)
    err = jnp.sqrt(diff * diff + _EPS)          # Charbonnier
    block_sum = jnp.sum(err)                    # scalar partial sum (this batch)

    # Lane-dense, unmasked store of the partial sum (splat across the tile).
    out_ref[...] = jnp.full(out_ref.shape, block_sum, dtype=jnp.float32)


@jax.jit
def l1_sobel_loss(x, y):
    """Fused Pallas TPU version of L1_Sobel_loss.forward(X, Y).  x, y: (N,1,H,W)."""
    if x.shape != y.shape:
        raise ValueError(f"shape mismatch {x.shape} vs {y.shape}")
    N, C, H, W = x.shape
    if C != 1:
        raise ValueError("Sobel2D expects single-channel input")

    x3 = x.reshape(N, H, W).astype(jnp.float32)
    y3 = y.reshape(N, H, W).astype(jnp.float32)

    # TODO(synk): for large images add a row-tiled spatial grid axis (1-row halo
    # via the index_map) so a block never exceeds scoped VMEM; at small patch
    # sizes a whole image per grid step is optimal.
    partials = pl.pallas_call(
        _l1_sobel_kernel,
        out_shape=jax.ShapeDtypeStruct((N, 8, 128), jnp.float32),
        grid_spec=pltpu.PrefetchScalarGridSpec(
            num_scalar_prefetch=0,
            grid=(N,),
            in_specs=[
                pl.BlockSpec((1, H, W), lambda n: (n, 0, 0)),
                pl.BlockSpec((1, H, W), lambda n: (n, 0, 0)),
            ],
            out_specs=pl.BlockSpec((1, 8, 128), lambda n: (n, 0, 0)),
            scratch_shapes=[
                pltpu.VMEM((H + 2 * _PAD_R, W + 2 * _PAD_C), jnp.float32),
                pltpu.VMEM((H + 2 * _PAD_R, W + 2 * _PAD_C), jnp.float32),
            ],
        ),
        compiler_params=pltpu.CompilerParams(
            dimension_semantics=("parallel",)),   # batch elements independent
    )(x3, y3)

    # Tiny final reduction over the N per-batch partial sums (plain JAX).
    return jnp.sum(partials[:, 0, 0])


def _reference_loss(x, y):
    """Pure-JAX reference mirroring the PyTorch module (for a sanity check)."""
    kx = jnp.array([[1., 0., -1.], [2., 0., -2.], [1., 0., -1.]],
                   jnp.float32).reshape(1, 1, 3, 3)
    ky = jnp.array([[1., 2., 1.], [0., 0., 0.], [-1., -2., -1.]],
                   jnp.float32).reshape(1, 1, 3, 3)

    def sobel(img):
        dn = ('NCHW', 'OIHW', 'NCHW')
        ex = lax.conv_general_dilated(img, kx, (1, 1), 'SAME',
                                      dimension_numbers=dn,
                                      precision=lax.Precision.HIGHEST)
        ey = lax.conv_general_dilated(img, ky, (1, 1), 'SAME',
                                      dimension_numbers=dn,
                                      precision=lax.Precision.HIGHEST)
        return jnp.abs(ex) + jnp.abs(ey)

    d = sobel(x) - sobel(y)
    return jnp.sum(jnp.sqrt(d * d + _EPS))


if __name__ == "__main__":
    key = jax.random.PRNGKey(0)
    k1, k2 = jax.random.split(key)
    N, C, H, W = 2, 1, 16, 16
    X = jax.random.normal(k1, (N, C, H, W), jnp.float32)
    Y = jax.random.normal(k2, (N, C, H, W), jnp.float32)

    loss = jax.block_until_ready(l1_sobel_loss(X, Y))
    ref = jax.block_until_ready(_reference_loss(X, Y))

    assert loss.shape == (), loss.shape
    assert bool(jnp.isfinite(loss)), loss
    assert bool(jnp.allclose(loss, ref, rtol=2e-4, atol=1e-3)), (loss, ref)
    print("KERNEL_OK")
</pallas_src>

<mosaic_0001>
module attributes {stable_mosaic.version = 11 : i64} {
  func.func @_l1_sobel_kernel(%arg0: i32, %arg1: memref<1x16x16xf32, #tpu.memory_space<vmem>>, %arg2: memref<1x16x16xf32, #tpu.memory_space<vmem>>, %arg3: memref<1x8x128xf32, #tpu.memory_space<vmem>>, %arg4: memref<32x272xf32, #tpu.memory_space<vmem>>, %arg5: memref<32x272xf32, #tpu.memory_space<vmem>>) attributes {dimension_semantics = [#tpu.dimension_semantics<parallel>], iteration_bounds = array<i64: 2>, scalar_prefetch = 0 : i64, scratch_operands = 2 : i64, tpu.core_type = #tpu.core_type<tc>, window_params = [{transform_indices = @transform_0, window_bounds = array<i64: 1, 16, 16>}, {transform_indices = @transform_1, window_bounds = array<i64: 1, 16, 16>}, {transform_indices = @transform_2, window_bounds = array<i64: 1, 8, 128>}]} {
    %cst = arith.constant 0.000000e+00 : f32
    %0 = vector.broadcast %cst : f32 to vector<32x272xf32>
    %c0 = arith.constant 0 : index
    %c0_0 = arith.constant 0 : index
    %1 = vector.load %arg4[%c0, %c0_0] : memref<32x272xf32, #tpu.memory_space<vmem>>, vector<32x272xf32>
    tpu.vector_store %arg4[%c0, %c0_0], %0 {strides = array<i32>} : memref<32x272xf32, #tpu.memory_space<vmem>>, vector<32x272xf32>,
    %cst_1 = arith.constant 0.000000e+00 : f32
    %2 = vector.broadcast %cst_1 : f32 to vector<32x272xf32>
    %c0_2 = arith.constant 0 : index
    %c0_3 = arith.constant 0 : index
    %3 = vector.load %arg5[%c0_2, %c0_3] : memref<32x272xf32, #tpu.memory_space<vmem>>, vector<32x272xf32>
    tpu.vector_store %arg5[%c0_2, %c0_3], %2 {strides = array<i32>} : memref<32x272xf32, #tpu.memory_space<vmem>>, vector<32x272xf32>,
    %c0_4 = arith.constant 0 : index
    %c0_5 = arith.constant 0 : index
    %c0_6 = arith.constant 0 : index
    %4 = vector.load %arg1[%c0_4, %c0_5, %c0_6] : memref<1x16x16xf32, #tpu.memory_space<vmem>>, vector<1x16x16xf32>
    %5 = vector.shape_cast %4 : vector<1x16x16xf32> to vector<16x16xf32>
    %c8 = arith.constant 8 : index
    %c128 = arith.constant 128 : index
    %6 = vector.load %arg4[%c8, %c128] : memref<32x272xf32, #tpu.memory_space<vmem>>, vector<16x16xf32>
    tpu.vector_store %arg4[%c8, %c128], %5 {strides = array<i32>} : memref<32x272xf32, #tpu.memory_space<vmem>>, vector<16x16xf32>,
    %c0_7 = arith.constant 0 : index
    %c0_8 = arith.constant 0 : index
    %c0_9 = arith.constant 0 : index
    %7 = vector.load %arg2[%c0_7, %c0_8, %c0_9] : memref<1x16x16xf32, #tpu.memory_space<vmem>>, vector<1x16x16xf32>
    %8 = vector.shape_cast %7 : vector<1x16x16xf32> to vector<16x16xf32>
    %c8_10 = arith.constant 8 : index
    %c128_11 = arith.constant 128 : index
    %9 = vector.load %arg5[%c8_10, %c128_11] : memref<32x272xf32, #tpu.memory_space<vmem>>, vector<16x16xf32>
    tpu.vector_store %arg5[%c8_10, %c128_11], %8 {strides = array<i32>} : memref<32x272xf32, #tpu.memory_space<vmem>>, vector<16x16xf32>,
    %c7 = arith.constant 7 : index
    %c127 = arith.constant 127 : index
    %10 = vector.load %arg4[%c7, %c127] : memref<32x272xf32, #tpu.memory_space<vmem>>, vector<16x16xf32>
    %c7_12 = arith.constant 7 : index
    %c128_13 = arith.constant 128 : index
    %11 = vector.load %arg4[%c7_12, %c128_13] : memref<32x272xf32, #tpu.memory_space<vmem>>, vector<16x16xf32>
    %c7_14 = arith.constant 7 : index
    %c129 = arith.constant 129 : index
    %12 = vector.load %arg4[%c7_14, %c129] : memref<32x272xf32, #tpu.memory_space<vmem>>, vector<16x16xf32>
    %c8_15 = arith.constant 8 : index
    %c127_16 = arith.constant 127 : index
    %13 = vector.load %arg4[%c8_15, %c127_16] : memref<32x272xf32, #tpu.memory_space<vmem>>, vector<16x16xf32>
    %c8_17 = arith.constant 8 : index
    %c129_18 = arith.constant 129 : index
    %14 = vector.load %arg4[%c8_17, %c129_18] : memref<32x272xf32, #tpu.memory_space<vmem>>, vector<16x16xf32>
    %c9 = arith.constant 9 : index
    %c127_19 = arith.constant 127 : index
    %15 = vector.load %arg4[%c9, %c127_19] : memref<32x272xf32, #tpu.memory_space<vmem>>, vector<16x16xf32>
    %c9_20 = arith.constant 9 : index
    %c128_21 = arith.constant 128 : index
    %16 = vector.load %arg4[%c9_20, %c128_21] : memref<32x272xf32, #tpu.memory_space<vmem>>, vector<16x16xf32>
    %c9_22 = arith.constant 9 : index
    %c129_23 = arith.constant 129 : index
    %17 = vector.load %arg4[%c9_22, %c129_23] : memref<32x272xf32, #tpu.memory_space<vmem>>, vector<16x16xf32>
    %18 = arith.subf %10, %12 : vector<16x16xf32>
    %19 = arith.subf %13, %14 : vector<16x16xf32>
    %cst_24 = arith.constant 2.000000e+00 : f32
    %20 = vector.broadcast %cst_24 : f32 to vector<16x16xf32>
    %21 = arith.mulf %20, %19 : vector<16x16xf32>
    %22 = arith.addf %18, %21 : vector<16x16xf32>
    %23 = arith.subf %15, %17 : vector<16x16xf32>
    %24 = arith.addf %22, %23 : vector<16x16xf32>
    %cst_25 = arith.constant 2.000000e+00 : f32
    %25 = vector.broadcast %cst_25 : f32 to vector<16x16xf32>
    %26 = arith.mulf %25, %11 : vector<16x16xf32>
    %27 = arith.addf %10, %26 : vector<16x16xf32>
    %28 = arith.addf %27, %12 : vector<16x16xf32>
    %cst_26 = arith.constant 2.000000e+00 : f32
    %29 = vector.broadcast %cst_26 : f32 to vector<16x16xf32>
    %30 = arith.mulf %29, %16 : vector<16x16xf32>
    %31 = arith.addf %15, %30 : vector<16x16xf32>
    %32 = arith.addf %31, %17 : vector<16x16xf32>
    %33 = arith.subf %28, %32 : vector<16x16xf32>
    %34 = math.absf %24 : vector<16x16xf32>
    %35 = math.absf %33 : vector<16x16xf32>
    %36 = arith.addf %34, %35 : vector<16x16xf32>
    %c7_27 = arith.constant 7 : index
    %c127_28 = arith.constant 127 : index
    %37 = vector.load %arg5[%c7_27, %c127_28] : memref<32x272xf32, #tpu.memory_space<vmem>>, vector<16x16xf32>
    %c7_29 = arith.constant 7 : index
    %c128_30 = arith.constant 128 : index
    %38 = vector.load %arg5[%c7_29, %c128_30] : memref<32x272xf32, #tpu.memory_space<vmem>>, vector<16x16xf32>
    %c7_31 = arith.constant 7 : index
    %c129_32 = arith.constant 129 : index
    %39 = vector.load %arg5[%c7_31, %c129_32] : memref<32x272xf32, #tpu.memory_space<vmem>>, vector<16x16xf32>
    %c8_33 = arith.constant 8 : index
    %c127_34 = arith.constant 127 : index
    %40 = vector.load %arg5[%c8_33, %c127_34] : memref<32x272xf32, #tpu.memory_space<vmem>>, vector<16x16xf32>
    %c8_35 = arith.constant 8 : index
    %c129_36 = arith.constant 129 : index
    %41 = vector.load %arg5[%c8_35, %c129_36] : memref<32x272xf32, #tpu.memory_space<vmem>>, vector<16x16xf32>
    %c9_37 = arith.constant 9 : index
    %c127_38 = arith.constant 127 : index
    %42 = vector.load %arg5[%c9_37, %c127_38] : memref<32x272xf32, #tpu.memory_space<vmem>>, vector<16x16xf32>
    %c9_39 = arith.constant 9 : index
    %c128_40 = arith.constant 128 : index
    %43 = vector.load %arg5[%c9_39, %c128_40] : memref<32x272xf32, #tpu.memory_space<vmem>>, vector<16x16xf32>
    %c9_41 = arith.constant 9 : index
    %c129_42 = arith.constant 129 : index
    %44 = vector.load %arg5[%c9_41, %c129_42] : memref<32x272xf32, #tpu.memory_space<vmem>>, vector<16x16xf32>
    %45 = arith.subf %37, %39 : vector<16x16xf32>
    %46 = arith.subf %40, %41 : vector<16x16xf32>
    %cst_43 = arith.constant 2.000000e+00 : f32
    %47 = vector.broadcast %cst_43 : f32 to vector<16x16xf32>
    %48 = arith.mulf %47, %46 : vector<16x16xf32>
    %49 = arith.addf %45, %48 : vector<16x16xf32>
    %50 = arith.subf %42, %44 : vector<16x16xf32>
    %51 = arith.addf %49, %50 : vector<16x16xf32>
    %cst_44 = arith.constant 2.000000e+00 : f32
    %52 = vector.broadcast %cst_44 : f32 to vector<16x16xf32>
    %53 = arith.mulf %52, %38 : vector<16x16xf32>
    %54 = arith.addf %37, %53 : vector<16x16xf32>
    %55 = arith.addf %54, %39 : vector<16x16xf32>
    %cst_45 = arith.constant 2.000000e+00 : f32
    %56 = vector.broadcast %cst_45 : f32 to vector<16x16xf32>
    %57 = arith.mulf %56, %43 : vector<16x16xf32>
    %58 = arith.addf %42, %57 : vector<16x16xf32>
    %59 = arith.addf %58, %44 : vector<16x16xf32>
    %60 = arith.subf %55, %59 : vector<16x16xf32>
    %61 = math.absf %51 : vector<16x16xf32>
    %62 = math.absf %60 : vector<16x16xf32>
    %63 = arith.addf %61, %62 : vector<16x16xf32>
    %64 = arith.subf %36, %63 : vector<16x16xf32>
    %65 = arith.mulf %64, %64 : vector<16x16xf32>
    %cst_46 = arith.constant 9.99999997E-7 : f32
    %66 = vector.broadcast %cst_46 : f32 to vector<16x16xf32>
    %67 = arith.addf %65, %66 : vector<16x16xf32>
    %68 = math.sqrt %67 : vector<16x16xf32>
    %69 = vector.shape_cast %68 : vector<16x16xf32> to vector<1x16x16xf32>
    %cst_47 = arith.constant dense<0.000000e+00> : vector<1xf32>
    %70 = vector.multi_reduction <add>, %69, %cst_47 [1, 2] : vector<1x16x16xf32> to vector<1xf32>
    %71 = vector.shape_cast %70 : vector<1xf32> to vector<1x1x1xf32>
    %72 = vector.extract %71[0, 0, 0] : f32 from vector<1x1x1xf32>
    %73 = vector.broadcast %72 : f32 to vector<1x8x128xf32>
    %c0_48 = arith.constant 0 : index
    %c0_49 = arith.constant 0 : index
    %c0_50 = arith.constant 0 : index
    %74 = vector.load %arg3[%c0_48, %c0_49, %c0_50] : memref<1x8x128xf32, #tpu.memory_space<vmem>>, vector<1x8x128xf32>
    tpu.vector_store %arg3[%c0_48, %c0_49, %c0_50], %73 {strides = array<i32>} : memref<1x8x128xf32, #tpu.memory_space<vmem>>, vector<1x8x128xf32>,
    return
  }
  func.func @transform_0(%arg0: i32) -> (i32, i32, i32) {
    %c0_i32 = arith.constant 0 : i32
    %c0_i32_0 = arith.constant 0 : i32
    %c0_i32_1 = arith.constant 0 : i32
    return %arg0, %c0_i32, %c0_i32_0 : i32, i32, i32
  }
  func.func @transform_1(%arg0: i32) -> (i32, i32, i32) {
    %c0_i32 = arith.constant 0 : i32
    %c0_i32_0 = arith.constant 0 : i32
    %c0_i32_1 = arith.constant 0 : i32
    return %arg0, %c0_i32, %c0_i32_0 : i32, i32, i32
  }
  func.func @transform_2(%arg0: i32) -> (i32, i32, i32) {
    %c0_i32 = arith.constant 0 : i32
    %c0_i32_0 = arith.constant 0 : i32
    %c0_i32_1 = arith.constant 0 : i32
    return %arg0, %c0_i32, %c0_i32_0 : i32, i32, i32
  }
}

</mosaic_0001>

<llo_original>
// kernel: l1_sobel_loss.1
$region0: #{l1_sobel_loss.1}
  #allocation0 [shape = 'u32[]', space=smem, size = 0x4, offset = 0x4, fixed_abs, tag = 'smem constant byte address 0x4 - core index']
  #allocation1 [shape = 'u32[144,128]{1,0:T(1,128)}', space=vmem, size = 0x12000, scoped, tag = 'internal scratch']
  #allocation2 [shape = 'f32[32,272]{1,0:T(8,128)}', space=vmem, size = 0xc000, scoped, tag = 'scratch operand']
  #allocation3 [shape = 'f32[32,272]{1,0:T(8,128)}', space=vmem, size = 0xc000, scoped, tag = 'scratch operand']
  %s0 = inlined_call_operand.hbm [shape: f32[2,16,16], index: 0, kind: input, shape index: {}]
  %s1 = inlined_call_operand.hbm [shape: f32[2,16,16], index: 1, kind: input, shape index: {}]
  %s2 = inlined_call_operand.vmem [shape: f32[2,8,128], index: 2, kind: output, shape index: {}]
  %s3 = sld [smem:[#allocation0]]
  $region49: #{l1_sobel_loss.1} parent=0
    _
  %s5 = ssub.s32 1, %s3
  %s6 = scalar_select 0, %s5, %s3
  $region1: #{l1_sobel_loss.1} parent=0
    #allocation4 [shape = 'u8[16384]{0}', space=vmem, size = 0x4000, scoped, tag = 'input window, operand 0']
    #allocation5 [shape = 's32[2]{0}', space=sflag, size = 0x8, scoped, tag = 'scoped memory for l1_sobel_loss.1']
    #allocation6 [shape = 'u8[16384]{0}', space=vmem, size = 0x4000, scoped, tag = 'input window, operand 1']
    #allocation7 [shape = 's32[2]{0}', space=sflag, size = 0x8, scoped, tag = 'scoped memory for l1_sobel_loss.1']
    %7 = vsyncpa [#allocation5], 0
    %s8 = scalar_lea.sflag [#allocation5], 1
    %9 = vsyncpa %s8, 0
    %10 = vsyncpa [#allocation7], 0
    %s11 = scalar_lea.sflag [#allocation7], 1
    %12 = vsyncpa %s11, 0
    loop: start=0, step=1, limit=4
    $region2: #{l1_sobel_loss.1} parent=1 // loop_pre_header
      _
    $region3: #{l1_sobel_loss.1} parent=1 // loop_header
      %s14 = sphi 0, %s18
      %p15 = scmp.ge.s32.totalorder %s14, 4
      %s24 = sphi 0, %s26
      %s27 = sphi 0, %s24
      %s28 = sphi 0, %s27
      %s44 = sphi 0, %s28
      %s50 = sphi 0, %s52
      %s53 = sphi 0, %s50
      %s54 = sphi 0, %s53
      %s70 = sphi 0, %s54
      %s76 = sphi 0, %s78
      %s79 = sphi 0, %s76
      %s80 = sphi 0, %s79
      %s96 = sphi 0, %s80
    $region4: #{l1_sobel_loss.1} parent=1 // loop_header_branch
      %17 = sbr.rel (%p15) target = $region8
    $region5: #{l1_sobel_loss.1} parent=1 // loop_body
      %s19 = ssub.s32 %s14, 1
      %s20 = ssub.s32 %s14, 2
      %s21 = sadd.s32 %s14, 1
      %s22 = ssub.s32 %s14, %s21
      %p23 = scmp.eq.s32.totalorder %s22, 0
      %s25 = sadd.s32 %s24, 1
      %s26 = scalar_select %p23, %s24, %s25
      %p29 = pneg %p23
      %p30 = scmp.eq.s32.totalorder %s14, 1
      %p31 = por %p29, %p30
      %p32 = scmp.ne.s32.totalorder %s24, %s27
      %p33 = scmp.eq.s32.totalorder %s14, 0
      %p34 = por %p32, %p33
      %p35 = scmp.ne.s32.totalorder %s24, %s27
      %p36 = scmp.eq.s32.totalorder %s19, 1
      %p37 = por %p35, %p36
      %p38 = scmp.ne.s32.totalorder %s27, %s28
      %p39 = scmp.eq.s32.totalorder %s19, 0
      %p40 = por %p38, %p39
      %p41 = scmp.ne.s32.totalorder %s27, %s28
      %p42 = scmp.eq.s32.totalorder %s20, 1
      %p43 = por %p41, %p42
      %p45 = scmp.ne.s32.totalorder %s28, %s44
      %p46 = scmp.eq.s32.totalorder %s20, 0
      %p47 = por %p45, %p46
      %s48 = ssub.s32 %s14, %s21
      %p49 = scmp.eq.s32.totalorder %s48, 0
      %s51 = sadd.s32 %s50, 1
      %s52 = scalar_select %p49, %s50, %s51
      %p55 = pneg %p49
      %p56 = scmp.eq.s32.totalorder %s14, 1
      %p57 = por %p55, %p56
      %p58 = scmp.ne.s32.totalorder %s50, %s53
      %p59 = scmp.eq.s32.totalorder %s14, 0
      %p60 = por %p58, %p59
      %p61 = scmp.ne.s32.totalorder %s50, %s53
      %p62 = scmp.eq.s32.totalorder %s19, 1
      %p63 = por %p61, %p62
      %p64 = scmp.ne.s32.totalorder %s53, %s54
      %p65 = scmp.eq.s32.totalorder %s19, 0
      %p66 = por %p64, %p65
      %p67 = scmp.ne.s32.totalorder %s53, %s54
      %p68 = scmp.eq.s32.totalorder %s20, 1
      %p69 = por %p67, %p68
      %p71 = scmp.ne.s32.totalorder %s54, %s70
      %p72 = scmp.eq.s32.totalorder %s20, 0
      %p73 = por %p71, %p72
      %s74 = ssub.s32 %s14, %s21
      %p75 = scmp.eq.s32.totalorder %s74, 0
      %s77 = sadd.s32 %s76, 1
      %s78 = scalar_select %p75, %s76, %s77
      %p81 = pneg %p75
      %p82 = scmp.eq.s32.totalorder %s14, 1
      %p83 = por %p81, %p82
      %p84 = scmp.ne.s32.totalorder %s76, %s79
      %p85 = scmp.eq.s32.totalorder %s14, 0
      %p86 = por %p84, %p85
      %p87 = scmp.ne.s32.totalorder %s76, %s79
      %p88 = scmp.eq.s32.totalorder %s19, 1
      %p89 = por %p87, %p88
      %p90 = scmp.ne.s32.totalorder %s79, %s80
      %p91 = scmp.eq.s32.totalorder %s19, 0
      %p92 = por %p90, %p91
      %p93 = scmp.ne.s32.totalorder %s79, %s80
      %p94 = scmp.eq.s32.totalorder %s20, 1
      %p95 = por %p93, %p94
      %p97 = scmp.ne.s32.totalorder %s80, %s96
      %p98 = scmp.eq.s32.totalorder %s20, 0
      %p99 = por %p97, %p98
      %p100 = scmp.le.s32.totalorder 1, %s14
      %p101 = scmp.lt.s32.totalorder %s14, 3
      %p102 = pnand %p100, %p101
      %p103 = pneg %p102
      // Predicated region
      $region9: #{l1_sobel_loss.1} parent=5 // pred_check
        _
      $region10: #{l1_sobel_loss.1} parent=5 // pred_check_branch
        %105 = sbr.rel (%p102) target = $region12
      $region11: #{l1_sobel_loss.1} parent=5 // pred_region
        %s106 = ssub.s32 %s14, 1
      $region12: #{l1_sobel_loss.1} parent=5 // pred_fallthru
        _
      %p107 = scmp.lt.s32.totalorder %s14, 2
      // Predicated region
      $region13: #{l1_sobel_loss.1} parent=5 // pred_check
        %p108 = pneg %p107
      $region14: #{l1_sobel_loss.1} parent=5 // pred_check_branch
        %110 = sbr.rel (%p108) target = $region16
      $region15: #{l1_sobel_loss.1} parent=5 // pred_region
        // Predicated region
        $region17: #{l1_sobel_loss.1} parent=15 // pred_check
          %p111 = pneg %p34
        $region18: #{l1_sobel_loss.1} parent=15 // pred_check_branch
          %113 = sbr.rel (%p111) target = $region20
        $region19: #{l1_sobel_loss.1} parent=15 // pred_region
          %s114 = sand.u32 %s24, 1
          %s115 = scalar_lea.sflag [#allocation5], %s114
          %s116 = sand.u32 %s24, 1
          %s117 = smul.addr %s116, 16
          %s118 = scalar_lea.vmem [#allocation4], %s117
          %s120 = ssub.s32 256, 256
          %121 = vsyncadd %s115, %s120
          %s122 = smul.addr %s14, 2
          %s123 = smul.addr %s122, 128
          %s124 = scalar_lea.hbm %s0, %s123
          %s125 = sshll.u32 %s118, 4
          %s126 = int_to_ptr.vmem [resolvable:$true] %s125
          %131 = dma.hbm_to_vmem [thread:$0]  %s124, 256, %s126, %s115, 128, 128, 8
        $region20: #{l1_sobel_loss.1} parent=15 // pred_fallthru
          _
        // Predicated region
        $region21: #{l1_sobel_loss.1} parent=15 // pred_check
          %p132 = pneg %p60
        $region22: #{l1_sobel_loss.1} parent=15 // pred_check_branch
          %134 = sbr.rel (%p132) target = $region24
        $region23: #{l1_sobel_loss.1} parent=15 // pred_region
          %s135 = sand.u32 %s50, 1
          %s136 = scalar_lea.sflag [#allocation7], %s135
          %s137 = sand.u32 %s50, 1
          %s138 = smul.addr %s137, 16
          %s139 = scalar_lea.vmem [#allocation6], %s138
          %s141 = ssub.s32 256, 256
          %142 = vsyncadd %s136, %s141
          %s143 = smul.addr %s14, 2
          %s144 = smul.addr %s143, 128
          %s145 = scalar_lea.hbm %s1, %s144
          %s146 = sshll.u32 %s139, 4
          %s147 = int_to_ptr.vmem [resolvable:$true] %s146
          %152 = dma.hbm_to_vmem [thread:$0]  %s145, 256, %s147, %s136, 128, 128, 8
        $region24: #{l1_sobel_loss.1} parent=15 // pred_fallthru
          _
      $region16: #{l1_sobel_loss.1} parent=5 // pred_fallthru
        _
      %p153 = scmp.le.s32.totalorder 1, %s14
      %p154 = scmp.lt.s32.totalorder %s14, 3
      %p155 = pnand %p153, %p154
      %p156 = pneg %p155
      // Predicated region
      $region25: #{l1_sobel_loss.1} parent=5 // pred_check
        _
      $region26: #{l1_sobel_loss.1} parent=5 // pred_check_branch
        %158 = sbr.rel (%p155) target = $region28
      $region27: #{l1_sobel_loss.1} parent=5 // pred_region
        %s159 = ssub.s32 %s14, 1
        %s160 = sand.u32 %s27, 1
        %s161 = scalar_lea.sflag [#allocation5], %s160
        %s162 = sand.u32 %s27, 1
        %s163 = smul.addr %s162, 16
        %s164 = scalar_lea.vmem [#allocation4], %s163
        // Predicated region
        $region29: #{l1_sobel_loss.1} parent=27 // pred_check
          %p165 = pneg %p40
        $region30: #{l1_sobel_loss.1} parent=27 // pred_check_branch
          %167 = sbr.rel (%p165) target = $region32
        $region31: #{l1_sobel_loss.1} parent=27 // pred_region
          %168 = dma.done %s161, 256
        $region32: #{l1_sobel_loss.1} parent=27 // pred_fallthru
          _
        %s169 = sand.u32 %s53, 1
        %s170 = scalar_lea.sflag [#allocation7], %s169
        %s171 = sand.u32 %s53, 1
        %s172 = smul.addr %s171, 16
        %s173 = scalar_lea.vmem [#allocation6], %s172
        // Predicated region
        $region33: #{l1_sobel_loss.1} parent=27 // pred_check
          %p174 = pneg %p66
        $region34: #{l1_sobel_loss.1} parent=27 // pred_check_branch
          %176 = sbr.rel (%p174) target = $region36
        $region35: #{l1_sobel_loss.1} parent=27 // pred_region
          %177 = dma.done %s170, 256
        $region36: #{l1_sobel_loss.1} parent=27 // pred_fallthru
          _
        %s178 = sand.u32 %s27, 1
        %s179 = scalar_lea.sflag [#allocation5], %s178
        %s180 = sand.u32 %s27, 1
        %s181 = smul.addr %s180, 16
        %s182 = scalar_lea.vmem [#allocation4], %s181
        %p183 = pneg %p40
        %p184 = pneg %p37
        %s185 = sand.u32 %s53, 1
        %s186 = scalar_lea.sflag [#allocation7], %s185
        %s187 = sand.u32 %s53, 1
        %s188 = smul.addr %s187, 16
        %s189 = scalar_lea.vmem [#allocation6], %s188
        %p190 = pneg %p66
        %p191 = pneg %p63
        %p192 = pneg %p92
        %p193 = pneg %p89
        %p194 = scmp.lt.s32.totalorder %s19, 1
        %s195 = scalar_select %p194, %s19, 1
        %s196 = smul.addr %s195, 8
        %s197 = scalar_lea.vmem %s2, %s196
        %p198 = scmp.lt.s32.totalorder %s19, 1
        %s199 = scalar_select %p198, %s19, 1
        %s200 = smul.addr %s199, 8
        %s201 = scalar_lea.vmem %s2, %s200
        %202 = vst [vmem:[#allocation2] sm:$0xff] 0.0
        %203 = vst [vmem:[#allocation2 + $0x8] sm:$0xff] 0.0
        %vm204 = vcmask 130048
        %205 = vst.msk [vmem:[#allocation2 + $0x10] sm:$0xff] %vm204, 0.0
        %206 = vst [vmem:[#allocation2 + $0x18] sm:$0xff] 0.0
        %207 = vst [vmem:[#allocation2 + $0x20] sm:$0xff] 0.0
        %208 = vst.msk [vmem:[#allocation2 + $0x28] sm:$0xff] %vm204, 0.0
        %209 = vst [vmem:[#allocation2 + $0x30] sm:$0xff] 0.0
        %210 = vst [vmem:[#allocation2 + $0x38] sm:$0xff] 0.0
        %211 = vst.msk [vmem:[#allocation2 + $0x40] sm:$0xff] %vm204, 0.0
        %212 = vst [vmem:[#allocation2 + $0x48] sm:$0xff] 0.0
        %213 = vst [vmem:[#allocation2 + $0x50] sm:$0xff] 0.0
        %214 = vst.msk [vmem:[#allocation2 + $0x58] sm:$0xff] %vm204, 0.0
        %215 = vst [vmem:[#allocation3] sm:$0xff] 0.0
        %216 = vst [vmem:[#allocation3 + $0x8] sm:$0xff] 0.0
        %217 = vst.msk [vmem:[#allocation3 + $0x10] sm:$0xff] %vm204, 0.0
        %218 = vst [vmem:[#allocation3 + $0x18] sm:$0xff] 0.0
        %219 = vst [vmem:[#allocation3 + $0x20] sm:$0xff] 0.0
        %220 = vst.msk [vmem:[#allocation3 + $0x28] sm:$0xff] %vm204, 0.0
        %221 = vst [vmem:[#allocation3 + $0x30] sm:$0xff] 0.0
        %222 = vst [vmem:[#allocation3 + $0x38] sm:$0xff] 0.0
        %223 = vst.msk [vmem:[#allocation3 + $0x40] sm:$0xff] %vm204, 0.0
        %224 = vst [vmem:[#allocation3 + $0x48] sm:$0xff] 0.0
        %225 = vst [vmem:[#allocation3 + $0x50] sm:$0xff] 0.0
        %226 = vst.msk [vmem:[#allocation3 + $0x58] sm:$0xff] %vm204, 0.0
        %v227 = vld [vmem:[%s164] sm:$0xff]
        %v228 = vld [vmem:[%s164 + $0x8] sm:$0xff]
        %229 = vst.msk [vmem:[#allocation2 + $0x20] sm:$0xff] %vm204, %v227
        %230 = vst.msk [vmem:[#allocation2 + $0x38] sm:$0xff] %vm204, %v228
        %v231 = vld [vmem:[%s173] sm:$0xff]
        %v232 = vld [vmem:[%s173 + $0x8] sm:$0xff]
        %233 = vst.msk [vmem:[#allocation3 + $0x20] sm:$0xff] %vm204, %v231
        %234 = vst.msk [vmem:[#allocation3 + $0x38] sm:$0xff] %vm204, %v232
        %v235 = vld [vmem:[#allocation2] sm:$0x80]
        %v236 = vld [vmem:[#allocation2 + $0x8] sm:$0x80]
        %v237 = vld [vmem:[#allocation2 + $0x18] sm:$0xff]
        %v238 = vld [vmem:[#allocation2 + $0x20] sm:$0xff]
        %v239 = vld [vmem:[#allocation2 + $0x30] sm:$0x7f]
        %v240 = vld [vmem:[#allocation2 + $0x38] sm:$0x7f]
        %v241 = vld [vmem:[#allocation2 + $0x30] sm:$0xff]
        %v242 = vld [vmem:[#allocation2 + $0x38] sm:$0xff]
        %v243 = vld [vmem:[#allocation2 + $0x18] sm:$0xfe]
        %v244 = vld [vmem:[#allocation2 + $0x20] sm:$0xfe]
        %v245 = vld [vmem:[#allocation2 + $0x48] sm:$0x1]
        %v246 = vld [vmem:[#allocation2 + $0x50] sm:$0x1]
        %250 = vrot.lane.b32.xlu0 %v236, 126
        %v251 = vpop.permute.xlu0 %250
        %252 = vrot.lane.b32.xlu0 %v238, 126
        %v253 = vpop.permute.xlu0 %252
        %254 = vrot.lane.b32.xlu0 %v240, 126
        %v255 = vpop.permute.xlu0 %254
        %v259 = vsub.f32 %v235, %v251
        %v260 = vsub.f32 %v236, %v251
        %v261 = vsub.f32 %v237, %v253
        %v262 = vsub.f32 %v238, %v253
        %v263 = vsub.f32 %v239, %v255
        %v264 = vsub.f32 %v240, %v255
        %266 = vrot.lane.b32.xlu0 %v242, 126
        %v267 = vpop.permute.xlu0 %266
        %v269 = vsub.f32 %v241, %v267
        %v270 = vsub.f32 %v242, %v267
        %v271 = vmul.f32 %v261, 2.0
        %v272 = vmul.f32 %v262, 2.0
        %v273 = vmul.f32 %v269, 2.0
        %v274 = vmul.f32 %v270, 2.0
        %vm279 = vcmask 1046528
        %v280 = vrot.slane %v271, 1
        %v281 = vrot.slane %v272, 1
        %v282 = vrot.slane %v273, 1
        %v283 = vsel %vm279, %v280, %v282
        %v284 = vrot.slane %v274, 1
        %v285 = vsel %vm279, %v281, %v284
        %v292 = vadd.f32 %v259, %v280
        %v293 = vadd.f32 %v260, %v281
        %v294 = vadd.f32 %v261, %v283
        %v295 = vadd.f32 %v262, %v285
        %v296 = vadd.f32 %v263, %v282
        %v297 = vadd.f32 %v264, %v284
        %300 = vrot.lane.b32.xlu0 %v244, 126
        %v301 = vpop.permute.xlu0 %300
        %302 = vrot.lane.b32.xlu0 %v246, 126
        %v303 = vpop.permute.xlu0 %302
        %v306 = vsub.f32 %v243, %v301
        %v307 = vsub.f32 %v244, %v301
        %v308 = vsub.f32 %v245, %v303
        %v309 = vsub.f32 %v246, %v303
        %vm316 = vcmask 1045504
        %v317 = vrot.slane %v306, 2
        %v318 = vrot.slane %v307, 2
        %v319 = vrot.slane %v269, 2
        %v320 = vsel %vm316, %v317, %v319
        %v321 = vrot.slane %v270, 2
        %v322 = vsel %vm316, %v318, %v321
        %v323 = vrot.slane %v308, 2
        %v324 = vsel %vm316, %v319, %v323
        %v325 = vrot.slane %v309, 2
        %v326 = vsel %vm316, %v321, %v325
        %v333 = vadd.f32 %v292, %v317
        %v334 = vadd.f32 %v293, %v318
        %v335 = vadd.f32 %v294, %v320
        %v336 = vadd.f32 %v295, %v322
        %v337 = vadd.f32 %v296, %v324
        %v338 = vadd.f32 %v297, %v326
        %v339 = vmul.f32 %v236, 2.0
        %v340 = vmul.f32 %v238, 2.0
        %v341 = vmul.f32 %v240, 2.0
        %345 = vrot.lane.b32.xlu0 %v339, 127
        %v346 = vpop.permute.xlu0 %345
        %347 = vrot.lane.b32.xlu0 %v340, 127
        %v348 = vpop.permute.xlu0 %347
        %349 = vrot.lane.b32.xlu0 %v341, 127
        %v350 = vpop.permute.xlu0 %349
        %v354 = vadd.f32 %v235, %v346
        %v355 = vadd.f32 %v236, %v346
        %v356 = vadd.f32 %v237, %v348
        %v357 = vadd.f32 %v238, %v348
        %v358 = vadd.f32 %v239, %v350
        %v359 = vadd.f32 %v240, %v350
        %v360 = vadd.f32 %v354, %v251
        %v361 = vadd.f32 %v355, %v251
        %v362 = vadd.f32 %v356, %v253
        %v363 = vadd.f32 %v357, %v253
        %v364 = vadd.f32 %v358, %v255
        %v365 = vadd.f32 %v359, %v255
        %v366 = vmul.f32 %v244, 2.0
        %v367 = vmul.f32 %v242, 2.0
        %v368 = vmul.f32 %v246, 2.0
        %372 = vrot.lane.b32.xlu0 %v366, 127
        %v373 = vpop.permute.xlu0 %372
        %374 = vrot.lane.b32.xlu0 %v367, 127
        %v375 = vpop.permute.xlu0 %374
        %376 = vrot.lane.b32.xlu0 %v368, 127
        %v377 = vpop.permute.xlu0 %376
        %v381 = vadd.f32 %v243, %v373
        %v382 = vadd.f32 %v244, %v373
        %v383 = vadd.f32 %v241, %v375
        %v384 = vadd.f32 %v242, %v375
        %v385 = vadd.f32 %v245, %v377
        %v386 = vadd.f32 %v246, %v377
        %v387 = vadd.f32 %v381, %v301
        %v388 = vadd.f32 %v382, %v301
        %v389 = vadd.f32 %v383, %v267
        %v390 = vadd.f32 %v384, %v267
        %v391 = vadd.f32 %v385, %v303
        %v392 = vadd.f32 %v386, %v303
        %v399 = vrot.slane %v387, 2
        %v400 = vrot.slane %v388, 2
        %v401 = vrot.slane %v389, 2
        %v402 = vsel %vm316, %v399, %v401
        %v403 = vrot.slane %v390, 2
        %v404 = vsel %vm316, %v400, %v403
        %v405 = vrot.slane %v391, 2
        %v406 = vsel %vm316, %v401, %v405
        %v407 = vrot.slane %v392, 2
        %v408 = vsel %vm316, %v403, %v407
        %v415 = vsub.f32 %v360, %v399
        %v416 = vsub.f32 %v361, %v400
        %v417 = vsub.f32 %v362, %v402
        %v418 = vsub.f32 %v363, %v404
        %v419 = vsub.f32 %v364, %v406
        %v420 = vsub.f32 %v365, %v408
        %v421 = vand.u32 2147483647, %v333
        %v422 = vand.u32 2147483647, %v334
        %v423 = vand.u32 2147483647, %v335
        %v424 = vand.u32 2147483647, %v336
        %v425 = vand.u32 2147483647, %v337
        %v426 = vand.u32 2147483647, %v338
        %v427 = vand.u32 2147483647, %v415
        %v428 = vand.u32 2147483647, %v416
        %v429 = vand.u32 2147483647, %v417
        %v430 = vand.u32 2147483647, %v418
        %v431 = vand.u32 2147483647, %v419
        %v432 = vand.u32 2147483647, %v420
        %v433 = vadd.f32 %v421, %v427
        %v434 = vadd.f32 %v422, %v428
        %v435 = vadd.f32 %v423, %v429
        %v436 = vadd.f32 %v424, %v430
        %v437 = vadd.f32 %v425, %v431
        %v438 = vadd.f32 %v426, %v432
        %v439 = vld [vmem:[#allocation3] sm:$0x80]
        %v440 = vld [vmem:[#allocation3 + $0x8] sm:$0x80]
        %v441 = vld [vmem:[#allocation3 + $0x18] sm:$0xff]
        %v442 = vld [vmem:[#allocation3 + $0x20] sm:$0xff]
        %v443 = vld [vmem:[#allocation3 + $0x30] sm:$0x7f]
        %v444 = vld [vmem:[#allocation3 + $0x38] sm:$0x7f]
        %v445 = vld [vmem:[#allocation3 + $0x30] sm:$0xff]
        %v446 = vld [vmem:[#allocation3 + $0x38] sm:$0xff]
        %v447 = vld [vmem:[#allocation3 + $0x18] sm:$0xfe]
        %v448 = vld [vmem:[#allocation3 + $0x20] sm:$0xfe]
        %v449 = vld [vmem:[#allocation3 + $0x48] sm:$0x1]
        %v450 = vld [vmem:[#allocation3 + $0x50] sm:$0x1]
        %454 = vrot.lane.b32.xlu0 %v440, 126
        %v455 = vpop.permute.xlu0 %454
        %456 = vrot.lane.b32.xlu0 %v442, 126
        %v457 = vpop.permute.xlu0 %456
        %458 = vrot.lane.b32.xlu0 %v444, 126
        %v459 = vpop.permute.xlu0 %458
        %v463 = vsub.f32 %v439, %v455
        %v464 = vsub.f32 %v440, %v455
        %v465 = vsub.f32 %v441, %v457
        %v466 = vsub.f32 %v442, %v457
        %v467 = vsub.f32 %v443, %v459
        %v468 = vsub.f32 %v444, %v459
        %470 = vrot.lane.b32.xlu0 %v446, 126
        %v471 = vpop.permute.xlu0 %470
        %v473 = vsub.f32 %v445, %v471
        %v474 = vsub.f32 %v446, %v471
        %v475 = vmul.f32 %v465, 2.0
        %v476 = vmul.f32 %v466, 2.0
        %v477 = vmul.f32 %v473, 2.0
        %v478 = vmul.f32 %v474, 2.0
        %v483 = vrot.slane %v475, 1
        %v484 = vrot.slane %v476, 1
        %v485 = vrot.slane %v477, 1
        %v486 = vsel %vm279, %v483, %v485
        %v487 = vrot.slane %v478, 1
        %v488 = vsel %vm279, %v484, %v487
        %v495 = vadd.f32 %v463, %v483
        %v496 = vadd.f32 %v464, %v484
        %v497 = vadd.f32 %v465, %v486
        %v498 = vadd.f32 %v466, %v488
        %v499 = vadd.f32 %v467, %v485
        %v500 = vadd.f32 %v468, %v487
        %503 = vrot.lane.b32.xlu0 %v448, 126
        %v504 = vpop.permute.xlu0 %503
        %505 = vrot.lane.b32.xlu0 %v450, 126
        %v506 = vpop.permute.xlu0 %505
        %v509 = vsub.f32 %v447, %v504
        %v510 = vsub.f32 %v448, %v504
        %v511 = vsub.f32 %v449, %v506
        %v512 = vsub.f32 %v450, %v506
        %v519 = vrot.slane %v509, 2
        %v520 = vrot.slane %v510, 2
        %v521 = vrot.slane %v473, 2
        %v522 = vsel %vm316, %v519, %v521
        %v523 = vrot.slane %v474, 2
        %v524 = vsel %vm316, %v520, %v523
        %v525 = vrot.slane %v511, 2
        %v526 = vsel %vm316, %v521, %v525
        %v527 = vrot.slane %v512, 2
        %v528 = vsel %vm316, %v523, %v527
        %v535 = vadd.f32 %v495, %v519
        %v536 = vadd.f32 %v496, %v520
        %v537 = vadd.f32 %v497, %v522
        %v538 = vadd.f32 %v498, %v524
        %v539 = vadd.f32 %v499, %v526
        %v540 = vadd.f32 %v500, %v528
        %v541 = vmul.f32 %v440, 2.0
        %v542 = vmul.f32 %v442, 2.0
        %v543 = vmul.f32 %v444, 2.0
        %547 = vrot.lane.b32.xlu0 %v541, 127
        %v548 = vpop.permute.xlu0 %547
        %549 = vrot.lane.b32.xlu0 %v542, 127
        %v550 = vpop.permute.xlu0 %549
        %551 = vrot.lane.b32.xlu0 %v543, 127
        %v552 = vpop.permute.xlu0 %551
        %v556 = vadd.f32 %v439, %v548
        %v557 = vadd.f32 %v440, %v548
        %v558 = vadd.f32 %v441, %v550
        %v559 = vadd.f32 %v442, %v550
        %v560 = vadd.f32 %v443, %v552
        %v561 = vadd.f32 %v444, %v552
        %v562 = vadd.f32 %v556, %v455
        %v563 = vadd.f32 %v557, %v455
        %v564 = vadd.f32 %v558, %v457
        %v565 = vadd.f32 %v559, %v457
        %v566 = vadd.f32 %v560, %v459
        %v567 = vadd.f32 %v561, %v459
        %v568 = vmul.f32 %v448, 2.0
        %v569 = vmul.f32 %v446, 2.0
        %v570 = vmul.f32 %v450, 2.0
        %574 = vrot.lane.b32.xlu0 %v568, 127
        %v575 = vpop.permute.xlu0 %574
        %576 = vrot.lane.b32.xlu0 %v569, 127
        %v577 = vpop.permute.xlu0 %576
        %578 = vrot.lane.b32.xlu0 %v570, 127
        %v579 = vpop.permute.xlu0 %578
        %v583 = vadd.f32 %v447, %v575
        %v584 = vadd.f32 %v448, %v575
        %v585 = vadd.f32 %v445, %v577
        %v586 = vadd.f32 %v446, %v577
        %v587 = vadd.f32 %v449, %v579
        %v588 = vadd.f32 %v450, %v579
        %v589 = vadd.f32 %v583, %v504
        %v590 = vadd.f32 %v584, %v504
        %v591 = vadd.f32 %v585, %v471
        %v592 = vadd.f32 %v586, %v471
        %v593 = vadd.f32 %v587, %v506
        %v594 = vadd.f32 %v588, %v506
        %v601 = vrot.slane %v589, 2
        %v602 = vrot.slane %v590, 2
        %v603 = vrot.slane %v591, 2
        %v604 = vsel %vm316, %v601, %v603
        %v605 = vrot.slane %v592, 2
        %v606 = vsel %vm316, %v602, %v605
        %v607 = vrot.slane %v593, 2
        %v608 = vsel %vm316, %v603, %v607
        %v609 = vrot.slane %v594, 2
        %v610 = vsel %vm316, %v605, %v609
        %v617 = vsub.f32 %v562, %v601
        %v618 = vsub.f32 %v563, %v602
        %v619 = vsub.f32 %v564, %v604
        %v620 = vsub.f32 %v565, %v606
        %v621 = vsub.f32 %v566, %v608
        %v622 = vsub.f32 %v567, %v610
        %v623 = vand.u32 2147483647, %v535
        %v624 = vand.u32 2147483647, %v536
        %v625 = vand.u32 2147483647, %v537
        %v626 = vand.u32 2147483647, %v538
        %v627 = vand.u32 2147483647, %v539
        %v628 = vand.u32 2147483647, %v540
        %v629 = vand.u32 2147483647, %v617
        %v630 = vand.u32 2147483647, %v618
        %v631 = vand.u32 2147483647, %v619
        %v632 = vand.u32 2147483647, %v620
        %v633 = vand.u32 2147483647, %v621
        %v634 = vand.u32 2147483647, %v622
        %v635 = vadd.f32 %v623, %v629
        %v636 = vadd.f32 %v624, %v630
        %v637 = vadd.f32 %v625, %v631
        %v638 = vadd.f32 %v626, %v632
        %v639 = vadd.f32 %v627, %v633
        %v640 = vadd.f32 %v628, %v634
        %v641 = vsub.f32 %v433, %v635
        %v642 = vsub.f32 %v434, %v636
        %v643 = vsub.f32 %v435, %v637
        %v644 = vsub.f32 %v436, %v638
        %v645 = vsub.f32 %v437, %v639
        %v646 = vsub.f32 %v438, %v640
        %v647 = vmul.f32 %v641, %v641
        %v648 = vmul.f32 %v642, %v642
        %v649 = vmul.f32 %v643, %v643
        %v650 = vmul.f32 %v644, %v644
        %v651 = vmul.f32 %v645, %v645
        %v652 = vmul.f32 %v646, %v646
        %v653 = vadd.f32 %v647, 1e-06
        %v654 = vadd.f32 %v648, 1e-06
        %v655 = vadd.f32 %v649, 1e-06
        %v656 = vadd.f32 %v650, 1e-06
        %v657 = vadd.f32 %v651, 1e-06
        %v658 = vadd.f32 %v652, 1e-06
        %v659 = vrsqrt.pop %v653
        %v660 = vmul.f32 %v653, %v659
        %vm661 = vcmp.eq.f32.partialorder %v653, inf
        %v662 = vsel %vm661, %v653, %v660
        %vm663 = vcmp.eq.f32.partialorder %v653, 0.0
        %v664 = vand.u32 %v653, 2147483648
        %v665 = vsel %vm663, %v664, %v662
        %v666 = vrsqrt.pop %v654
        %v667 = vmul.f32 %v654, %v666
        %vm668 = vcmp.eq.f32.partialorder %v654, inf
        %v669 = vsel %vm668, %v654, %v667
        %vm670 = vcmp.eq.f32.partialorder %v654, 0.0
        %v671 = vand.u32 %v654, 2147483648
        %v672 = vsel %vm670, %v671, %v669
        %v673 = vrsqrt.pop %v655
        %v674 = vmul.f32 %v655, %v673
        %vm675 = vcmp.eq.f32.partialorder %v655, inf
        %v676 = vsel %vm675, %v655, %v674
        %vm677 = vcmp.eq.f32.partialorder %v655, 0.0
        %v678 = vand.u32 %v655, 2147483648
        %v679 = vsel %vm677, %v678, %v676
        %v680 = vrsqrt.pop %v656
        %v681 = vmul.f32 %v656, %v680
        %vm682 = vcmp.eq.f32.partialorder %v656, inf
        %v683 = vsel %vm682, %v656, %v681
        %vm684 = vcmp.eq.f32.partialorder %v656, 0.0
        %v685 = vand.u32 %v656, 2147483648
        %v686 = vsel %vm684, %v685, %v683
        %v687 = vrsqrt.pop %v657
        %v688 = vmul.f32 %v657, %v687
        %vm689 = vcmp.eq.f32.partialorder %v657, inf
        %v690 = vsel %vm689, %v657, %v688
        %vm691 = vcmp.eq.f32.partialorder %v657, 0.0
        %v692 = vand.u32 %v657, 2147483648
        %v693 = vsel %vm691, %v692, %v690
        %v694 = vrsqrt.pop %v658
        %v695 = vmul.f32 %v658, %v694
        %vm696 = vcmp.eq.f32.partialorder %v658, inf
        %v697 = vsel %vm696, %v658, %v695
        %vm698 = vcmp.eq.f32.partialorder %v658, 0.0
        %v699 = vand.u32 %v658, 2147483648
        %v700 = vsel %vm698, %v699, %v697
        %vm707 = vcmask 1040384
        %v708 = vrot.slane %v665, 7
        %v709 = vrot.slane %v679, 7
        %v710 = vsel %vm707, %v708, %v709
        %v711 = vrot.slane %v672, 7
        %v712 = vrot.slane %v686, 7
        %v713 = vsel %vm707, %v711, %v712
        %v714 = vrot.slane %v693, 7
        %v715 = vsel %vm707, %v709, %v714
        %v716 = vrot.slane %v700, 7
        %v717 = vsel %vm707, %v712, %v716
        %718 = vrot.lane.b32.xlu0 %v710, 1
        %v719 = vpop.permute.xlu0 %718
        %720 = vrot.lane.b32.xlu0 %v713, 1
        %v721 = vpop.permute.xlu0 %720
        %722 = vrot.lane.b32.xlu0 %v715, 1
        %v723 = vpop.permute.xlu0 %722
        %724 = vrot.lane.b32.xlu0 %v717, 1
        %v725 = vpop.permute.xlu0 %724
        %vm726 = vcmask 7168
        %v727 = vsel %vm726, %v719, %v721
        %v728 = vsel %vm726, %v723, %v725
        %v731 = vsel %vm204, %v727, 0.0
        %v732 = vsel %vm204, %v728, 0.0
        %v733 = vadd.f32 %v731, %v732
        %734 = vadd.xlane.f32.xlu0 %v733
        %v735 = vpop.xlane.xlu0 %734
        %v736 = vrot.slane %v735, 4
        %v737 = vadd.f32 %v735, %v736
        %v738 = vrot.slane %v737, 2
        %v739 = vadd.f32 %v737, %v738
        %v740 = vrot.slane %v739, 1
        %v741 = vadd.f32 %v739, %v740
        %s742 = vtos %v741
        %v743 = vstv %s742
        %744 = vst [vmem:[%s201] sm:$0xff] %v743
        %p745 = scmp.lt.s32.totalorder %s19, 1
        %s746 = scalar_select %p745, %s19, 1
        %s747 = smul.addr %s746, 8
        %s748 = scalar_lea.vmem %s2, %s747
        // Predicated region
        $region37: #{l1_sobel_loss.1} parent=27 // pred_check
          %p749 = pneg %p89
        $region38: #{l1_sobel_loss.1} parent=27 // pred_check_branch
          %751 = sbr.rel (%p749) target = $region40
        $region39: #{l1_sobel_loss.1} parent=27 // pred_region
          _
        $region40: #{l1_sobel_loss.1} parent=27 // pred_fallthru
          _
      $region28: #{l1_sobel_loss.1} parent=5 // pred_fallthru
        _
      %p752 = scmp.le.s32.totalorder 2, %s14
      // Predicated region
      $region41: #{l1_sobel_loss.1} parent=5 // pred_check
        %p753 = pneg %p752
      $region42: #{l1_sobel_loss.1} parent=5 // pred_check_branch
        %755 = sbr.rel (%p753) target = $region44
      $region43: #{l1_sobel_loss.1} parent=5 // pred_region
        %s756 = ssub.s32 %s14, 2
        // Predicated region
        $region45: #{l1_sobel_loss.1} parent=43 // pred_check
          %p757 = pneg %p95
        $region46: #{l1_sobel_loss.1} parent=43 // pred_check_branch
          %759 = sbr.rel (%p757) target = $region48
        $region47: #{l1_sobel_loss.1} parent=43 // pred_region
          %p760 = scmp.lt.s32.totalorder %s20, 1
          %s761 = scalar_select %p760, %s20, 1
          %s762 = smul.addr %s761, 8
          %s763 = scalar_lea.vmem %s2, %s762
        $region48: #{l1_sobel_loss.1} parent=43 // pred_fallthru
          _
      $region44: #{l1_sobel_loss.1} parent=5 // pred_fallthru
        _
    $region6: #{l1_sobel_loss.1} parent=1 // loop_footer
      %s18 = sadd.s32 1, %s14
    $region7: #{l1_sobel_loss.1} parent=1 // loop_footer_branch
      %13 = sbr.rel target = $region3
    $region8: #{l1_sobel_loss.1} parent=1 // loop_exit
      _
    %764 = vsyncpa [#allocation5], 1
    %s765 = scalar_lea.sflag [#allocation5], 1
    %766 = vsyncpa %s765, 1
    %767 = vsyncpa [#allocation7], 1
    %s768 = scalar_lea.sflag [#allocation7], 1
    %769 = vsyncpa %s768, 1

</llo_original>
